<compile_context>
chip_gen: v6e
topology: v6e:2x2x1
jax: 0.10.0
libtpu: 0.0.40
codegen_flags: <defaults>
</compile_context>

<pallas_src>
import jax
import jax.numpy as jnp
from jax import lax
from jax.experimental import pallas as pl
from jax.experimental.pallas import tpu as pltpu

_VMEM_TILE_CAP = 256   # max rows per grid step, VMEM-resident path
_HBM_TILE_CAP = 32     # max rows per grid step (== DMAs in flight), HBM path


def _round_up(x, m):
    return ((x + m - 1) // m) * m


def _sublane_min(dtype):
    # minimum sublane tiling for the second-to-last dim: f32->8, bf16->16, int8->32
    itemsize = jnp.dtype(dtype).itemsize
    return max(8, 32 // max(itemsize, 1))


def _vmem_capacity_bytes():
    try:
        return int(pltpu.get_tpu_info().vmem_capacity_bytes)
    except Exception:
        return 64 * 1024 * 1024  # conservative default (v7x per-TensorCore)


def _gather_vmem_kernel(ids_ref, lat_ref, out_ref):
    """VMEM-resident path.

    ids_ref : (B_pad,) int32 in SMEM (scalar prefetch)
    lat_ref : (N_samples, F_pad) latents, fully resident in VMEM
    out_ref : (TILE_B, F_pad) VMEM output tile for this grid step
    """
    tb = out_ref.shape[0]                 # static tile size
    base = pl.program_id(0) * tb          # first batch row of this tile

    def body(i, carry):
        row = ids_ref[base + i]
        out_ref[pl.ds(i, 1), :] = lat_ref[pl.ds(row, 1), :]
        return carry

    lax.fori_loop(0, tb, body, 0, unroll=(tb <= 16))


def _gather_hbm_kernel(ids_ref, lat_hbm, out_ref, sems):
    """HBM fallback path: per-row DMAs, all started before any wait.

    ids_ref : (B_pad,) int32 in SMEM (scalar prefetch)
    lat_hbm : (N_samples, F_pad) latents left in HBM (pl.ANY)
    out_ref : (TILE_B, F_pad) VMEM output tile for this grid step
    sems    : (TILE_B,) DMA semaphores
    """
    tb = out_ref.shape[0]
    base = pl.program_id(0) * tb

    copies = []
    for i in range(tb):
        row = ids_ref[base + i]
        cp = pltpu.make_async_copy(
            lat_hbm.at[pl.ds(row, 1), :],
            out_ref.at[pl.ds(i, 1), :],
            sems.at[i],
        )
        cp.start()                        # keep all tb copies in flight
        copies.append(cp)
    for cp in copies:                     # wait on the *same* descriptors
        cp.wait()


def latent_container_forward(latents, batch_ids, dims, lumped=False,
                             force_path=None):
    """Pallas equivalent of LatentContainer.forward.

    latents:   (N_samples, N_features) float32 (parameter table)
    batch_ids: (B,) int32
    returns:   (B, 1, ..., 1, N_features) with `dims` ones (1 one if lumped)
    """
    n_samples, n_features = latents.shape
    b = batch_ids.shape[0]
    dtype = latents.dtype
    itemsize = jnp.dtype(dtype).itemsize
    sub_min = _sublane_min(dtype)

    # Lane-dense feature dim: pad to a multiple of 128 (avoids masked stores).
    f_pad = _round_up(n_features, 128)
    lat = latents
    if f_pad != n_features:
        lat = jnp.pad(latents, ((0, 0), (0, f_pad - n_features)))
    lat_bytes = n_samples * f_pad * itemsize

    # Choose path: VMEM-resident fast path vs HBM row-DMA fallback.
    vmem_cap = _vmem_capacity_bytes()
    if force_path == "vmem":
        use_vmem = True
    elif force_path == "hbm":
        use_vmem = False
    else:
        tile_guess = min(_VMEM_TILE_CAP, _round_up(b, sub_min))
        need = 2 * lat_bytes + 4 * tile_guess * f_pad * itemsize + (4 << 20)
        use_vmem = need <= int(0.75 * vmem_cap)

    # Dtype-aware batch tile; keep it no larger than the (padded) batch.
    tile_cap = _VMEM_TILE_CAP if use_vmem else _HBM_TILE_CAP
    tile = min(tile_cap, _round_up(b, sub_min))
    b_pad = _round_up(b, tile)

    ids = batch_ids.astype(jnp.int32)
    if b_pad != b:
        ids = jnp.pad(ids, (0, b_pad - b))   # padded ids -> row 0 (valid, sliced off)

    grid = (b_pad // tile,)
    out_shape = jax.ShapeDtypeStruct((b_pad, f_pad), dtype)
    out_spec = pl.BlockSpec((tile, f_pad), lambda i, ids_ref: (i, 0))

    if use_vmem:
        vmem_limit = int(min(vmem_cap - (8 << 20),
                             2 * lat_bytes + 4 * tile * f_pad * itemsize + (16 << 20)))
        vmem_limit = max(vmem_limit, 32 << 20)
        gathered = pl.pallas_call(
            _gather_vmem_kernel,
            out_shape=out_shape,
            grid_spec=pltpu.PrefetchScalarGridSpec(
                num_scalar_prefetch=1,                       # batch_ids -> SMEM
                grid=grid,
                in_specs=[
                    # full latents table resident in VMEM (constant block index)
                    pl.BlockSpec((n_samples, f_pad), lambda i, ids_ref: (0, 0)),
                ],
                out_specs=out_spec,
            ),
            compiler_params=pltpu.CompilerParams(
                dimension_semantics=("parallel",),
                vmem_limit_bytes=vmem_limit,
            ),
        )(ids, lat)
    else:
        gathered = pl.pallas_call(
            _gather_hbm_kernel,
            out_shape=out_shape,
            grid_spec=pltpu.PrefetchScalarGridSpec(
                num_scalar_prefetch=1,                       # batch_ids -> SMEM
                grid=grid,
                in_specs=[
                    pl.BlockSpec(memory_space=pl.ANY),       # latents stay in HBM
                ],
                out_specs=out_spec,
                scratch_shapes=[pltpu.SemaphoreType.DMA((tile,))],
            ),
            compiler_params=pltpu.CompilerParams(
                dimension_semantics=("parallel",),
            ),
        )(ids, lat)

    if b_pad != b or f_pad != n_features:
        gathered = gathered[:b, :n_features]

    n_ones = 1 if lumped else dims
    return gathered.reshape((b,) + (1,) * n_ones + (n_features,))


if __name__ == "__main__":
    # Small, deterministic setup consistent with the module's __init__.
    N_samples, N_features, dims = 16, 128, 2
    B = 8

    key = jax.random.PRNGKey(0)
    k_lat, k_ids = jax.random.split(key)
    # The PyTorch module initializes latents to zeros; use a deterministic
    # random init here so the gather is actually exercised.
    latents = jax.random.normal(k_lat, (N_samples, N_features), dtype=jnp.float32)
    batch_ids = jax.random.randint(k_ids, (B,), 0, N_samples, dtype=jnp.int32)

    # 1) VMEM-resident fast path (default for small tables).
    out = jax.block_until_ready(latent_container_forward(latents, batch_ids, dims))
    ref = latents[batch_ids].reshape((B,) + (1,) * dims + (N_features,))
    assert out.shape == (B, 1, 1, N_features), out.shape
    assert jnp.allclose(out, ref), "mismatch vs reference gather (vmem path)"

    # 2) lumped branch + non-multiple-of-tile batch + non-multiple-of-128 features.
    B2, F2 = 5, 96
    lat2 = jax.random.normal(jax.random.PRNGKey(2), (N_samples, F2), dtype=jnp.float32)
    ids2 = jax.random.randint(jax.random.PRNGKey(1), (B2,), 0, N_samples, jnp.int32)
    out2 = jax.block_until_ready(
        latent_container_forward(lat2, ids2, dims, lumped=True))
    ref2 = lat2[ids2].reshape((B2, 1, F2))
    assert out2.shape == (B2, 1, F2), out2.shape
    assert jnp.allclose(out2, ref2), "mismatch vs reference gather (lumped)"

    # 3) Forced HBM row-DMA fallback (used when latents won't fit in VMEM).
    out3 = jax.block_until_ready(
        latent_container_forward(latents, batch_ids, dims, force_path="hbm"))
    assert jnp.allclose(out3, ref), "mismatch vs reference gather (hbm path)"

    print("KERNEL_OK")
</pallas_src>

<mosaic_0001>
module attributes {stable_mosaic.version = 11 : i64} {
  func.func @_gather_vmem_kernel(%arg0: i32, %arg1: memref<8xi32, #tpu.memory_space<smem>>, %arg2: memref<16x128xf32, #tpu.memory_space<vmem>>, %arg3: memref<8x128xf32, #tpu.memory_space<vmem>>) attributes {dimension_semantics = [#tpu.dimension_semantics<parallel>], iteration_bounds = array<i64: 1>, scalar_prefetch = 1 : i64, scratch_operands = 0 : i64, tpu.core_type = #tpu.core_type<tc>, window_params = [{pipeline_mode = #tpu.pipeline_mode<synchronous>, transform_indices = @transform_0, window_bounds = array<i64: 16, 128>}, {transform_indices = @transform_1, window_bounds = array<i64: 8, 128>}]} {
    %c8_i32 = arith.constant 8 : i32
    %0 = arith.muli %arg0, %c8_i32 : i32
    %c0_i32 = arith.constant 0 : i32
    %1 = arith.addi %0, %c0_i32 : i32
    %2 = arith.index_cast %1 : i32 to index
    %3 = memref.load %arg1[%2] : memref<8xi32, #tpu.memory_space<smem>>
    %4 = arith.index_cast %3 : i32 to index
    %c0 = arith.constant 0 : index
    %5 = vector.load %arg2[%4, %c0] : memref<16x128xf32, #tpu.memory_space<vmem>>, vector<1x128xf32>
    %6 = arith.index_cast %c0_i32 : i32 to index
    %c0_0 = arith.constant 0 : index
    %7 = vector.load %arg3[%6, %c0_0] : memref<8x128xf32, #tpu.memory_space<vmem>>, vector<1x128xf32>
    tpu.vector_store %arg3[%6, %c0_0], %5 {strides = array<i32>} : memref<8x128xf32, #tpu.memory_space<vmem>>, vector<1x128xf32>,
    %c1_i32 = arith.constant 1 : i32
    %8 = arith.addi %0, %c1_i32 : i32
    %9 = arith.index_cast %8 : i32 to index
    %10 = memref.load %arg1[%9] : memref<8xi32, #tpu.memory_space<smem>>
    %11 = arith.index_cast %10 : i32 to index
    %c0_1 = arith.constant 0 : index
    %12 = vector.load %arg2[%11, %c0_1] : memref<16x128xf32, #tpu.memory_space<vmem>>, vector<1x128xf32>
    %13 = arith.index_cast %c1_i32 : i32 to index
    %c0_2 = arith.constant 0 : index
    %14 = vector.load %arg3[%13, %c0_2] : memref<8x128xf32, #tpu.memory_space<vmem>>, vector<1x128xf32>
    tpu.vector_store %arg3[%13, %c0_2], %12 {strides = array<i32>} : memref<8x128xf32, #tpu.memory_space<vmem>>, vector<1x128xf32>,
    %c2_i32 = arith.constant 2 : i32
    %15 = arith.addi %0, %c2_i32 : i32
    %16 = arith.index_cast %15 : i32 to index
    %17 = memref.load %arg1[%16] : memref<8xi32, #tpu.memory_space<smem>>
    %18 = arith.index_cast %17 : i32 to index
    %c0_3 = arith.constant 0 : index
    %19 = vector.load %arg2[%18, %c0_3] : memref<16x128xf32, #tpu.memory_space<vmem>>, vector<1x128xf32>
    %20 = arith.index_cast %c2_i32 : i32 to index
    %c0_4 = arith.constant 0 : index
    %21 = vector.load %arg3[%20, %c0_4] : memref<8x128xf32, #tpu.memory_space<vmem>>, vector<1x128xf32>
    tpu.vector_store %arg3[%20, %c0_4], %19 {strides = array<i32>} : memref<8x128xf32, #tpu.memory_space<vmem>>, vector<1x128xf32>,
    %c3_i32 = arith.constant 3 : i32
    %22 = arith.addi %0, %c3_i32 : i32
    %23 = arith.index_cast %22 : i32 to index
    %24 = memref.load %arg1[%23] : memref<8xi32, #tpu.memory_space<smem>>
    %25 = arith.index_cast %24 : i32 to index
    %c0_5 = arith.constant 0 : index
    %26 = vector.load %arg2[%25, %c0_5] : memref<16x128xf32, #tpu.memory_space<vmem>>, vector<1x128xf32>
    %27 = arith.index_cast %c3_i32 : i32 to index
    %c0_6 = arith.constant 0 : index
    %28 = vector.load %arg3[%27, %c0_6] : memref<8x128xf32, #tpu.memory_space<vmem>>, vector<1x128xf32>
    tpu.vector_store %arg3[%27, %c0_6], %26 {strides = array<i32>} : memref<8x128xf32, #tpu.memory_space<vmem>>, vector<1x128xf32>,
    %c4_i32 = arith.constant 4 : i32
    %29 = arith.addi %0, %c4_i32 : i32
    %30 = arith.index_cast %29 : i32 to index
    %31 = memref.load %arg1[%30] : memref<8xi32, #tpu.memory_space<smem>>
    %32 = arith.index_cast %31 : i32 to index
    %c0_7 = arith.constant 0 : index
    %33 = vector.load %arg2[%32, %c0_7] : memref<16x128xf32, #tpu.memory_space<vmem>>, vector<1x128xf32>
    %34 = arith.index_cast %c4_i32 : i32 to index
    %c0_8 = arith.constant 0 : index
    %35 = vector.load %arg3[%34, %c0_8] : memref<8x128xf32, #tpu.memory_space<vmem>>, vector<1x128xf32>
    tpu.vector_store %arg3[%34, %c0_8], %33 {strides = array<i32>} : memref<8x128xf32, #tpu.memory_space<vmem>>, vector<1x128xf32>,
    %c5_i32 = arith.constant 5 : i32
    %36 = arith.addi %0, %c5_i32 : i32
    %37 = arith.index_cast %36 : i32 to index
    %38 = memref.load %arg1[%37] : memref<8xi32, #tpu.memory_space<smem>>
    %39 = arith.index_cast %38 : i32 to index
    %c0_9 = arith.constant 0 : index
    %40 = vector.load %arg2[%39, %c0_9] : memref<16x128xf32, #tpu.memory_space<vmem>>, vector<1x128xf32>
    %41 = arith.index_cast %c5_i32 : i32 to index
    %c0_10 = arith.constant 0 : index
    %42 = vector.load %arg3[%41, %c0_10] : memref<8x128xf32, #tpu.memory_space<vmem>>, vector<1x128xf32>
    tpu.vector_store %arg3[%41, %c0_10], %40 {strides = array<i32>} : memref<8x128xf32, #tpu.memory_space<vmem>>, vector<1x128xf32>,
    %c6_i32 = arith.constant 6 : i32
    %43 = arith.addi %0, %c6_i32 : i32
    %44 = arith.index_cast %43 : i32 to index
    %45 = memref.load %arg1[%44] : memref<8xi32, #tpu.memory_space<smem>>
    %46 = arith.index_cast %45 : i32 to index
    %c0_11 = arith.constant 0 : index
    %47 = vector.load %arg2[%46, %c0_11] : memref<16x128xf32, #tpu.memory_space<vmem>>, vector<1x128xf32>
    %48 = arith.index_cast %c6_i32 : i32 to index
    %c0_12 = arith.constant 0 : index
    %49 = vector.load %arg3[%48, %c0_12] : memref<8x128xf32, #tpu.memory_space<vmem>>, vector<1x128xf32>
    tpu.vector_store %arg3[%48, %c0_12], %47 {strides = array<i32>} : memref<8x128xf32, #tpu.memory_space<vmem>>, vector<1x128xf32>,
    %c7_i32 = arith.constant 7 : i32
    %50 = arith.addi %0, %c7_i32 : i32
    %51 = arith.index_cast %50 : i32 to index
    %52 = memref.load %arg1[%51] : memref<8xi32, #tpu.memory_space<smem>>
    %53 = arith.index_cast %52 : i32 to index
    %c0_13 = arith.constant 0 : index
    %54 = vector.load %arg2[%53, %c0_13] : memref<16x128xf32, #tpu.memory_space<vmem>>, vector<1x128xf32>
    %55 = arith.index_cast %c7_i32 : i32 to index
    %c0_14 = arith.constant 0 : index
    %56 = vector.load %arg3[%55, %c0_14] : memref<8x128xf32, #tpu.memory_space<vmem>>, vector<1x128xf32>
    tpu.vector_store %arg3[%55, %c0_14], %54 {strides = array<i32>} : memref<8x128xf32, #tpu.memory_space<vmem>>, vector<1x128xf32>,
    %c8_i32_15 = arith.constant 8 : i32
    return
  }
  func.func @transform_0(%arg0: i32, %arg1: memref<8xi32, #tpu.memory_space<smem>>) -> (i32, i32) {
    %c0_i32 = arith.constant 0 : i32
    %c0_i32_0 = arith.constant 0 : i32
    %c0_i32_1 = arith.constant 0 : i32
    return %c0_i32, %c0_i32_0 : i32, i32
  }
  func.func @transform_1(%arg0: i32, %arg1: memref<8xi32, #tpu.memory_space<smem>>) -> (i32, i32) {
    %c0_i32 = arith.constant 0 : i32
    %c0_i32_0 = arith.constant 0 : i32
    return %arg0, %c0_i32 : i32, i32
  }
}

</mosaic_0001>

<llo_original>
// kernel: tpu_custom_call.1
$region0: #{tpu_custom_call.1}
  #allocation0 [shape = 'u32[]', space=smem, size = 0x4, offset = 0x4, fixed_abs, tag = 'smem constant byte address 0x4 - core index']
  #allocation1 [shape = 'u32[144,128]{1,0:T(1,128)}', space=vmem, size = 0x12000, scoped, tag = 'internal scratch']
  #allocation2 [shape = 's32[1]{0}', space=sflag, size = 0x4, scoped, tag = 'scoped memory for tpu_custom_call.1']
  #allocation3 [shape = 'u8[512]{0}', space=smem, size = 0x200, scoped, tag = 'prefetched SMEM operand 0']
  %s0 = inlined_call_operand.hbm [shape: s32[8], index: 0, kind: input, shape index: {}]
  %s1 = inlined_call_operand.hbm [shape: f32[16,128], index: 1, kind: input, shape index: {}]
  %s2 = inlined_call_operand.hbm [shape: f32[8,128], index: 2, kind: output, shape index: {}]
  %s3 = sld [smem:[#allocation0]]
  $region18: #{tpu_custom_call.1} parent=0
    _
  %s5 = ssub.s32 1, %s3
  %s6 = scalar_select 0, %s5, %s3
  %8 = dma.hbm_to_smem %s0, 16, [#allocation3], [#allocation2]
  %9 = dma.done [#allocation2], 16
  %10 = sfence
  $region1: #{tpu_custom_call.1} parent=0
    #allocation4 [shape = 'u8[8192]{0}', space=vmem, size = 0x2000, scoped, tag = 'input window, operand 1, single buffered']
    #allocation5 [shape = 's32[1]{0}', space=sflag, size = 0x4, scoped, tag = 'scoped memory for tpu_custom_call.1']
    #allocation6 [shape = 's32[1]{0}', space=sflag, size = 0x4, scoped, tag = 'scoped memory for tpu_custom_call.1']
    #allocation7 [shape = 'u8[4096]{0}', space=vmem, size = 0x1000, scoped, tag = 'output window, operand 0, single buffered']
    %11 = vsyncpa [#allocation5], 0
    %12 = vsyncpa [#allocation6], 0
    // Predicated region
    $region2: #{tpu_custom_call.1} parent=1 // pred_check
      _
    $region3: #{tpu_custom_call.1} parent=1 // pred_check_branch
      %14 = sbr.rel (0) target = $region5
    $region4: #{tpu_custom_call.1} parent=1 // pred_region
      %s16 = ssub.s32 256, 256
      %17 = vsyncadd [#allocation5], %s16
      %s18 = sshll.u32 [#allocation4], 4
      %s19 = int_to_ptr.vmem [resolvable:$true] %s18
      %24 = dma.hbm_to_vmem [thread:$0]  %s1, 256, %s19, [#allocation5], 128, 128, 8
    $region5: #{tpu_custom_call.1} parent=1 // pred_fallthru
      _
    // Predicated region
    $region6: #{tpu_custom_call.1} parent=1 // pred_check
      _
    $region7: #{tpu_custom_call.1} parent=1 // pred_check_branch
      %26 = sbr.rel (0) target = $region9
    $region8: #{tpu_custom_call.1} parent=1 // pred_region
      %27 = dma.done [#allocation5], 256
    $region9: #{tpu_custom_call.1} parent=1 // pred_fallthru
      _
    %s28 = smul.u32 0, 8
    %s29 = sld [smem:[#allocation3 + %s28]]
    %s30 = scalar_lea.vmem [#allocation4], %s29
    %v31 = vld [vmem:[%s30] sm:$0x1]
    %32 = vst [vmem:[#allocation7] sm:$0x1] %v31
    %s33 = sadd.s32 %s28, 1
    %s34 = sld [smem:[#allocation3 + %s33]]
    %s35 = scalar_lea.vmem [#allocation4], %s34
    %v36 = vld [vmem:[%s35] sm:$0x1]
    %37 = vst [vmem:[#allocation7 + $0x1] sm:$0x1] %v36
    %s38 = sadd.s32 %s28, 2
    %s39 = sld [smem:[#allocation3 + %s38]]
    %s40 = scalar_lea.vmem [#allocation4], %s39
    %v41 = vld [vmem:[%s40] sm:$0x1]
    %42 = vst [vmem:[#allocation7 + $0x2] sm:$0x1] %v41
    %s43 = sadd.s32 %s28, 3
    %s44 = sld [smem:[#allocation3 + %s43]]
    %s45 = scalar_lea.vmem [#allocation4], %s44
    %v46 = vld [vmem:[%s45] sm:$0x1]
    %47 = vst [vmem:[#allocation7 + $0x3] sm:$0x1] %v46
    %s48 = sadd.s32 %s28, 4
    %s49 = sld [smem:[#allocation3 + %s48]]
    %s50 = scalar_lea.vmem [#allocation4], %s49
    %v51 = vld [vmem:[%s50] sm:$0x1]
    %52 = vst [vmem:[#allocation7 + $0x4] sm:$0x1] %v51
    %s53 = sadd.s32 %s28, 5
    %s54 = sld [smem:[#allocation3 + %s53]]
    %s55 = scalar_lea.vmem [#allocation4], %s54
    %v56 = vld [vmem:[%s55] sm:$0x1]
    %57 = vst [vmem:[#allocation7 + $0x5] sm:$0x1] %v56
    %s58 = sadd.s32 %s28, 6
    %s59 = sld [smem:[#allocation3 + %s58]]
    %s60 = scalar_lea.vmem [#allocation4], %s59
    %v61 = vld [vmem:[%s60] sm:$0x1]
    %62 = vst [vmem:[#allocation7 + $0x6] sm:$0x1] %v61
    %s63 = sadd.s32 %s28, 7
    %s64 = sld [smem:[#allocation3 + %s63]]
    %s65 = scalar_lea.vmem [#allocation4], %s64
    %v66 = vld [vmem:[%s65] sm:$0x1]
    %67 = vst [vmem:[#allocation7 + $0x7] sm:$0x1] %v66
    // Predicated region
    $region10: #{tpu_custom_call.1} parent=1 // pred_check
      _
    $region11: #{tpu_custom_call.1} parent=1 // pred_check_branch
      %69 = sbr.rel (0) target = $region13
    $region12: #{tpu_custom_call.1} parent=1 // pred_region
      %s71 = ssub.s32 128, 128
      %72 = vsyncadd [#allocation6], %s71
      %s74 = sshll.u32 [#allocation7], 4
      %s75 = int_to_ptr.vmem [resolvable:$true] %s74
      %77 = dma.vmem_to_hbm [thread:$0]  %s75, 128, %s2, [#allocation6]
    $region13: #{tpu_custom_call.1} parent=1 // pred_fallthru
      _
    // Predicated region
    $region14: #{tpu_custom_call.1} parent=1 // pred_check
      _
    $region15: #{tpu_custom_call.1} parent=1 // pred_check_branch
      %79 = sbr.rel (0) target = $region17
    $region16: #{tpu_custom_call.1} parent=1 // pred_region
      %80 = dma.done [#allocation6], 128
    $region17: #{tpu_custom_call.1} parent=1 // pred_fallthru
      _
    %81 = vsyncpa [#allocation5], 1
    %82 = vsyncpa [#allocation6], 1

</llo_original>
